<compile_context>
chip_gen: v7x
topology: tpu7x:2x2x1
jax: 0.10.0
libtpu: 0.0.40
codegen_flags: <defaults>
</compile_context>

<pallas_src>
import functools
import math

import jax
import jax.numpy as jnp
from jax.experimental import pallas as pl
from jax.experimental.pallas import tpu as pltpu

SQRT_HALF = math.sqrt(0.5)


def _round_up(x, m):
    return (x + m - 1) // m * m


# ---------------------------------------------------------------------------
# Kernel: one (batch, L-tile) block.  All operands are channels-first so the
# matmuls are (C_out, C_in) @ (C_in, TILE_L) with lane-dense outputs.
# ---------------------------------------------------------------------------
def residual_block_kernel(hm_ref, hc_ref, hp_ref,
                          wgate_ref, bgate_ref, wout_ref, bout_ref,
                          y_ref, skip_ref, *, res_channels):
    # hm/hc/hp: (C, T)  = h shifted by -d / 0 / +d (already zero-padded, aligned)
    # wgate:    (3, 2C, C) fused dilated-conv weight (rows 0:C tanh, C:2C sigmoid)
    # bgate:    (2C, 1)
    # wout:     (C+S, C) fused res|skip 1x1 convs, bout: (C+S, 1)
    C = res_channels

    # Fused gated dilated conv: one (2C, C) @ (C, T) MXU matmul per tap.
    acc = jnp.dot(wgate_ref[0], hm_ref[...], preferred_element_type=jnp.float32)
    acc = acc + jnp.dot(wgate_ref[1], hc_ref[...], preferred_element_type=jnp.float32)
    acc = acc + jnp.dot(wgate_ref[2], hp_ref[...], preferred_element_type=jnp.float32)
    acc = acc + bgate_ref[...]                                   # (2C, 1) -> lane bcast

    out = jnp.tanh(acc[:C]) * jax.nn.sigmoid(acc[C:])            # (C, T)

    # Fused res|skip projection: one (C+S, C) @ (C, T) matmul.
    rs = jnp.dot(wout_ref[...], out, preferred_element_type=jnp.float32) + bout_ref[...]

    y_ref[...] = (hc_ref[...] + rs[:C]) * SQRT_HALF              # (x + part_t + res)*sqrt(.5)
    skip_ref[...] = rs[C:]


# ---------------------------------------------------------------------------
# Wrapper
# ---------------------------------------------------------------------------
def _choose_tile_l(L, C, S, budget_bytes=16 * 1024 * 1024):
    # f32, double-buffered blocks per grid step: 3 shifted h views + y + skip.
    bytes_per_col = 4 * 2 * (3 * C + C + S)
    t = budget_bytes // bytes_per_col
    t = max(128, min(1024, (t // 128) * 128))     # 128..1024, multiple of 128
    return int(min(t, _round_up(L, 128)))


def residual_block(x, emb, params, dilation=1, tile_l=None):
    """x: (B, C, L) float32 (NCL, like the PyTorch module), emb: (B, E) float32.
    Returns ((B, C, L), (B, S, L))."""
    B, C, L = x.shape
    CS = params["w_out"].shape[0]
    S = CS - C
    assert params["w_out"].shape[1] == C
    assert C % 8 == 0 and S % 8 == 0, "pad channel dims to a multiple of 8 (128 for perf)"
    d = int(dilation)

    # Hoisted embedding projection (an M=1 matmul inside the kernel wastes the MXU).
    part = emb @ params["w_fc"].T + params["b_fc"]               # (B, C)
    # Faithful `h = x; h += part_t`: the residual path uses h, not x.
    h = x + part[:, :, None]                                     # (B, C, L)

    T = int(tile_l) if tile_l else _choose_tile_l(L, C, S)
    Lp = _round_up(L, T)
    nT = Lp // T

    # Wrapper-side padding + three block-aligned shift views.  The zero padding
    # is exactly the conv's own zero padding; positions >= L are computed but
    # sliced off.  No in-kernel pad/concat/unaligned slices, and dilation halos
    # across L tiles come for free.
    hpad = jnp.pad(h, ((0, 0), (0, 0), (d, d + Lp - L)))
    h_m = hpad[:, :, 0:Lp]                  # h[l - d]
    h_c = hpad[:, :, d:d + Lp]              # h[l]
    h_p = hpad[:, :, 2 * d:2 * d + Lp]      # h[l + d]

    kernel = functools.partial(residual_block_kernel, res_channels=C)
    hspec = pl.BlockSpec((None, C, T), lambda b, j: (b, 0, j))

    cost = pl.CostEstimate(
        flops=2 * B * Lp * C * (3 * 2 * C + (C + S)),
        transcendentals=B * Lp * 2 * C,
        bytes_accessed=4 * (B * Lp * (3 * C + C + S)
                            + 3 * 2 * C * C + (C + S) * C + 2 * C + (C + S)),
    )

    y_p, skip_p = pl.pallas_call(
        kernel,
        out_shape=(jax.ShapeDtypeStruct((B, C, Lp), jnp.float32),
                   jax.ShapeDtypeStruct((B, S, Lp), jnp.float32)),
        grid=(B, nT),
        in_specs=[
            hspec,                                                  # h[l-d]
            hspec,                                                  # h[l]
            hspec,                                                  # h[l+d]
            pl.BlockSpec((3, 2 * C, C), lambda b, j: (0, 0, 0)),    # fused gate W
            pl.BlockSpec((2 * C, 1), lambda b, j: (0, 0)),          # gate bias
            pl.BlockSpec((C + S, C), lambda b, j: (0, 0)),          # fused res|skip W
            pl.BlockSpec((C + S, 1), lambda b, j: (0, 0)),          # res|skip bias
        ],
        out_specs=(pl.BlockSpec((None, C, T), lambda b, j: (b, 0, j)),
                   pl.BlockSpec((None, S, T), lambda b, j: (b, 0, j))),
        compiler_params=pltpu.CompilerParams(
            dimension_semantics=("parallel", "parallel"),   # B and L tiles independent
            vmem_limit_bytes=32 * 1024 * 1024),              # tiles sized to fit v7x too
        cost_estimate=cost,
    )(h_m, h_c, h_p,
      params["w_gate"], params["b_gate"], params["w_out"], params["b_out"])

    return y_p[:, :, :L], skip_p[:, :, :L]


# ---------------------------------------------------------------------------
# Parameter construction (weight_norm folded at parameter time) + reference
# ---------------------------------------------------------------------------
def weight_norm(v, g):
    """PyTorch nn.utils.weight_norm with dim=0: w = g * v / ||v|| over non-0 dims."""
    norm = jnp.sqrt(jnp.sum(v * v, axis=tuple(range(1, v.ndim)), keepdims=True))
    return g.reshape((-1,) + (1,) * (v.ndim - 1)) * v / norm


def make_params(key, res_channels, skip_channels, embed_dim):
    C, S, E = res_channels, skip_channels, embed_dim
    ks = jax.random.split(key, 11)
    # fc_t (nn.Linear E -> C)
    w_fc = jax.random.normal(ks[0], (C, E), jnp.float32) * (1.0 / math.sqrt(E))
    b_fc = jax.random.normal(ks[1], (C,), jnp.float32) * 0.1
    # dilated conv (weight-normed Conv1d C -> 2C, k=3)
    vdil = jax.random.normal(ks[2], (2 * C, C, 3), jnp.float32) * math.sqrt(2.0 / (3 * C))
    gdil = 0.5 + jax.random.uniform(ks[3], (2 * C,), jnp.float32)
    bdil = jax.random.normal(ks[4], (2 * C,), jnp.float32) * 0.1
    wdil = weight_norm(vdil, gdil)                            # (2C, C, 3)
    # res conv (weight-normed Conv1d C -> C, k=1)
    vres = jax.random.normal(ks[5], (C, C, 1), jnp.float32) * math.sqrt(2.0 / C)
    gres = 0.5 + jax.random.uniform(ks[6], (C,), jnp.float32)
    bres = jax.random.normal(ks[7], (C,), jnp.float32) * 0.1
    wres = weight_norm(vres, gres)[:, :, 0]                   # (C, C)
    # skip conv (weight-normed Conv1d C -> S, k=1)
    vskip = jax.random.normal(ks[8], (S, C, 1), jnp.float32) * math.sqrt(2.0 / C)
    gskip = 0.5 + jax.random.uniform(ks[9], (S,), jnp.float32)
    bskip = jax.random.normal(ks[10], (S,), jnp.float32) * 0.1
    wskip = weight_norm(vskip, gskip)[:, :, 0]                # (S, C)

    return {
        "w_fc": w_fc, "b_fc": b_fc,
        # fused gate weight, tap-major (3, 2C, C); rows 0:C tanh, C:2C sigmoid
        "w_gate": jnp.transpose(wdil, (2, 0, 1)),
        "b_gate": bdil.reshape(2 * C, 1),
        # fused res|skip 1x1 convs (C+S, C)
        "w_out": jnp.concatenate([wres, wskip], axis=0),
        "b_out": jnp.concatenate([bres, bskip]).reshape(C + S, 1),
        # unfused copies for the pure-JAX reference
        "wdil_full": wdil, "bdil_full": bdil,
        "w_res2d": wres, "b_res": bres, "w_skip2d": wskip, "b_skip": bskip,
    }


def reference(x, emb, p, dilation):
    """Pure-JAX replica of the PyTorch forward (for verification)."""
    C = x.shape[1]
    part = emb @ p["w_fc"].T + p["b_fc"]                      # (B, C)
    h = x + part[:, :, None]                                  # in-place `h += part_t`
    hc = jax.lax.conv_general_dilated(
        h, p["wdil_full"], window_strides=(1,),
        padding=[(dilation, dilation)], rhs_dilation=(dilation,),
        dimension_numbers=("NCH", "OIH", "NCH"))
    hc = hc + p["bdil_full"][None, :, None]
    out = jnp.tanh(hc[:, :C]) * jax.nn.sigmoid(hc[:, C:])
    res = jnp.einsum("bcl,oc->bol", out, p["w_res2d"]) + p["b_res"][None, :, None]
    skip = jnp.einsum("bcl,sc->bsl", out, p["w_skip2d"]) + p["b_skip"][None, :, None]
    return (h + res) * SQRT_HALF, skip


if __name__ == "__main__":
    key = jax.random.PRNGKey(0)
    kx1, ke1, kp, kx2, ke2 = jax.random.split(key, 5)

    B, C, S, E = 2, 8, 8, 32            # batch, res_channels, skip_channels, embed dim
    params = make_params(kp, C, S, E)

    # Case 1: tiny sequence (single L tile).
    L1, d1 = 16, 2
    x1 = jax.random.normal(kx1, (B, C, L1), jnp.float32)
    e1 = jax.random.normal(ke1, (B, E), jnp.float32)
    y1, s1 = jax.block_until_ready(residual_block(x1, e1, params, dilation=d1))
    yr1, sr1 = reference(x1, e1, params, d1)
    assert y1.shape == (B, C, L1) and s1.shape == (B, S, L1)
    assert jnp.allclose(y1, yr1, atol=1e-4, rtol=1e-4)
    assert jnp.allclose(s1, sr1, atol=1e-4, rtol=1e-4)

    # Case 2: multiple L tiles; dilation halo crosses tile boundaries.
    L2, d2 = 300, 4
    x2 = jax.random.normal(kx2, (B, C, L2), jnp.float32)
    e2 = jax.random.normal(ke2, (B, E), jnp.float32)
    y2, s2 = jax.block_until_ready(
        residual_block(x2, e2, params, dilation=d2, tile_l=128))
    yr2, sr2 = reference(x2, e2, params, d2)
    assert y2.shape == (B, C, L2) and s2.shape == (B, S, L2)
    assert jnp.allclose(y2, yr2, atol=1e-4, rtol=1e-4)
    assert jnp.allclose(s2, sr2, atol=1e-4, rtol=1e-4)

    print("KERNEL_OK")
</pallas_src>

<mosaic_0001>
module attributes {stable_mosaic.version = 11 : i64} {
  func.func @residual_block_kernel(%arg0: i32, %arg1: i32, %arg2: memref<1x8x128xf32, #tpu.memory_space<vmem>>, %arg3: memref<1x8x128xf32, #tpu.memory_space<vmem>>, %arg4: memref<1x8x128xf32, #tpu.memory_space<vmem>>, %arg5: memref<3x16x8xf32, #tpu.memory_space<vmem>>, %arg6: memref<16x1xf32, #tpu.memory_space<vmem>>, %arg7: memref<16x8xf32, #tpu.memory_space<vmem>>, %arg8: memref<16x1xf32, #tpu.memory_space<vmem>>, %arg9: memref<1x8x128xf32, #tpu.memory_space<vmem>>, %arg10: memref<1x8x128xf32, #tpu.memory_space<vmem>>) attributes {dimension_semantics = [#tpu.dimension_semantics<parallel>, #tpu.dimension_semantics<parallel>], iteration_bounds = array<i64: 2, 1>, scalar_prefetch = 0 : i64, scratch_operands = 0 : i64, tpu.core_type = #tpu.core_type<tc>, window_params = [{transform_indices = @transform_0, window_bounds = array<i64: 1, 8, 128>}, {transform_indices = @transform_1, window_bounds = array<i64: 1, 8, 128>}, {transform_indices = @transform_2, window_bounds = array<i64: 1, 8, 128>}, {pipeline_mode = #tpu.pipeline_mode<synchronous>, transform_indices = @transform_3, window_bounds = array<i64: 3, 16, 8>}, {pipeline_mode = #tpu.pipeline_mode<synchronous>, transform_indices = @transform_4, window_bounds = array<i64: 16, 1>}, {pipeline_mode = #tpu.pipeline_mode<synchronous>, transform_indices = @transform_5, window_bounds = array<i64: 16, 8>}, {pipeline_mode = #tpu.pipeline_mode<synchronous>, transform_indices = @transform_6, window_bounds = array<i64: 16, 1>}, {transform_indices = @transform_7, window_bounds = array<i64: 1, 8, 128>}, {transform_indices = @transform_8, window_bounds = array<i64: 1, 8, 128>}]} {
    %c0 = arith.constant 0 : index
    %c0_0 = arith.constant 0 : index
    %c0_1 = arith.constant 0 : index
    %0 = vector.load %arg5[%c0, %c0_0, %c0_1] : memref<3x16x8xf32, #tpu.memory_space<vmem>>, vector<1x16x8xf32>
    %1 = vector.shape_cast %0 : vector<1x16x8xf32> to vector<16x8xf32>
    %c0_2 = arith.constant 0 : index
    %c0_3 = arith.constant 0 : index
    %c0_4 = arith.constant 0 : index
    %2 = vector.load %arg2[%c0_2, %c0_3, %c0_4] : memref<1x8x128xf32, #tpu.memory_space<vmem>>, vector<1x8x128xf32>
    %3 = vector.shape_cast %2 : vector<1x8x128xf32> to vector<8x128xf32>
    %cst = arith.constant dense<0.000000e+00> : vector<16x128xf32>
    %4 = tpu.matmul %1, %3, %cst {dimension_numbers = #tpu.dot_dimension_numbers<[1], [0], [0], [1], [0, 0, 1, 1], [], []>} : vector<16x8xf32>, vector<8x128xf32>, vector<16x128xf32> -> vector<16x128xf32>
    %c1 = arith.constant 1 : index
    %c0_5 = arith.constant 0 : index
    %c0_6 = arith.constant 0 : index
    %5 = vector.load %arg5[%c1, %c0_5, %c0_6] : memref<3x16x8xf32, #tpu.memory_space<vmem>>, vector<1x16x8xf32>
    %6 = vector.shape_cast %5 : vector<1x16x8xf32> to vector<16x8xf32>
    %c0_7 = arith.constant 0 : index
    %c0_8 = arith.constant 0 : index
    %c0_9 = arith.constant 0 : index
    %7 = vector.load %arg3[%c0_7, %c0_8, %c0_9] : memref<1x8x128xf32, #tpu.memory_space<vmem>>, vector<1x8x128xf32>
    %8 = vector.shape_cast %7 : vector<1x8x128xf32> to vector<8x128xf32>
    %cst_10 = arith.constant dense<0.000000e+00> : vector<16x128xf32>
    %9 = tpu.matmul %6, %8, %cst_10 {dimension_numbers = #tpu.dot_dimension_numbers<[1], [0], [0], [1], [0, 0, 1, 1], [], []>} : vector<16x8xf32>, vector<8x128xf32>, vector<16x128xf32> -> vector<16x128xf32>
    %10 = arith.addf %4, %9 : vector<16x128xf32>
    %c2 = arith.constant 2 : index
    %c0_11 = arith.constant 0 : index
    %c0_12 = arith.constant 0 : index
    %11 = vector.load %arg5[%c2, %c0_11, %c0_12] : memref<3x16x8xf32, #tpu.memory_space<vmem>>, vector<1x16x8xf32>
    %12 = vector.shape_cast %11 : vector<1x16x8xf32> to vector<16x8xf32>
    %c0_13 = arith.constant 0 : index
    %c0_14 = arith.constant 0 : index
    %c0_15 = arith.constant 0 : index
    %13 = vector.load %arg4[%c0_13, %c0_14, %c0_15] : memref<1x8x128xf32, #tpu.memory_space<vmem>>, vector<1x8x128xf32>
    %14 = vector.shape_cast %13 : vector<1x8x128xf32> to vector<8x128xf32>
    %cst_16 = arith.constant dense<0.000000e+00> : vector<16x128xf32>
    %15 = tpu.matmul %12, %14, %cst_16 {dimension_numbers = #tpu.dot_dimension_numbers<[1], [0], [0], [1], [0, 0, 1, 1], [], []>} : vector<16x8xf32>, vector<8x128xf32>, vector<16x128xf32> -> vector<16x128xf32>
    %16 = arith.addf %10, %15 : vector<16x128xf32>
    %c0_17 = arith.constant 0 : index
    %c0_18 = arith.constant 0 : index
    %17 = vector.load %arg6[%c0_17, %c0_18] : memref<16x1xf32, #tpu.memory_space<vmem>>, vector<16x1xf32>
    %18 = vector.broadcast %17 : vector<16x1xf32> to vector<16x128xf32>
    %19 = arith.addf %16, %18 : vector<16x128xf32>
    %20 = vector.extract_strided_slice %19 {offsets = [0, 0], sizes = [8, 128], strides = [1, 1]} : vector<16x128xf32> to vector<8x128xf32>
    %21 = math.tanh %20 : vector<8x128xf32>
    %22 = vector.extract_strided_slice %19 {offsets = [8, 0], sizes = [8, 128], strides = [1, 1]} : vector<16x128xf32> to vector<8x128xf32>
    %23 = arith.negf %22 : vector<8x128xf32>
    %24 = math.exp %23 : vector<8x128xf32>
    %cst_19 = arith.constant 1.000000e+00 : f32
    %25 = vector.broadcast %cst_19 : f32 to vector<8x128xf32>
    %26 = arith.addf %25, %24 : vector<8x128xf32>
    %27 = arith.divf %25, %26 : vector<8x128xf32>
    %28 = arith.mulf %21, %27 : vector<8x128xf32>
    %c0_20 = arith.constant 0 : index
    %c0_21 = arith.constant 0 : index
    %29 = vector.load %arg7[%c0_20, %c0_21] : memref<16x8xf32, #tpu.memory_space<vmem>>, vector<16x8xf32>
    %cst_22 = arith.constant dense<0.000000e+00> : vector<16x128xf32>
    %30 = tpu.matmul %29, %28, %cst_22 {dimension_numbers = #tpu.dot_dimension_numbers<[1], [0], [0], [1], [0, 0, 1, 1], [], []>} : vector<16x8xf32>, vector<8x128xf32>, vector<16x128xf32> -> vector<16x128xf32>
    %c0_23 = arith.constant 0 : index
    %c0_24 = arith.constant 0 : index
    %31 = vector.load %arg8[%c0_23, %c0_24] : memref<16x1xf32, #tpu.memory_space<vmem>>, vector<16x1xf32>
    %32 = vector.broadcast %31 : vector<16x1xf32> to vector<16x128xf32>
    %33 = arith.addf %30, %32 : vector<16x128xf32>
    %c0_25 = arith.constant 0 : index
    %c0_26 = arith.constant 0 : index
    %c0_27 = arith.constant 0 : index
    %34 = vector.load %arg3[%c0_25, %c0_26, %c0_27] : memref<1x8x128xf32, #tpu.memory_space<vmem>>, vector<1x8x128xf32>
    %35 = vector.shape_cast %34 : vector<1x8x128xf32> to vector<8x128xf32>
    %36 = vector.extract_strided_slice %33 {offsets = [0, 0], sizes = [8, 128], strides = [1, 1]} : vector<16x128xf32> to vector<8x128xf32>
    %37 = arith.addf %35, %36 : vector<8x128xf32>
    %cst_28 = arith.constant 0.707106769 : f32
    %38 = vector.broadcast %cst_28 : f32 to vector<8x128xf32>
    %39 = arith.mulf %37, %38 : vector<8x128xf32>
    %c0_29 = arith.constant 0 : index
    %c0_30 = arith.constant 0 : index
    %c0_31 = arith.constant 0 : index
    %40 = vector.load %arg9[%c0_29, %c0_30, %c0_31] : memref<1x8x128xf32, #tpu.memory_space<vmem>>, vector<1x8x128xf32>
    %41 = vector.shape_cast %40 : vector<1x8x128xf32> to vector<8x128xf32>
    %42 = vector.shape_cast %39 : vector<8x128xf32> to vector<1x8x128xf32>
    tpu.vector_store %arg9[%c0_29, %c0_30, %c0_31], %42 {strides = array<i32>} : memref<1x8x128xf32, #tpu.memory_space<vmem>>, vector<1x8x128xf32>,
    %43 = vector.extract_strided_slice %33 {offsets = [8, 0], sizes = [8, 128], strides = [1, 1]} : vector<16x128xf32> to vector<8x128xf32>
    %c0_32 = arith.constant 0 : index
    %c0_33 = arith.constant 0 : index
    %c0_34 = arith.constant 0 : index
    %44 = vector.load %arg10[%c0_32, %c0_33, %c0_34] : memref<1x8x128xf32, #tpu.memory_space<vmem>>, vector<1x8x128xf32>
    %45 = vector.shape_cast %44 : vector<1x8x128xf32> to vector<8x128xf32>
    %46 = vector.shape_cast %43 : vector<8x128xf32> to vector<1x8x128xf32>
    tpu.vector_store %arg10[%c0_32, %c0_33, %c0_34], %46 {strides = array<i32>} : memref<1x8x128xf32, #tpu.memory_space<vmem>>, vector<1x8x128xf32>,
    return
  }
  func.func @transform_0(%arg0: i32, %arg1: i32) -> (i32, i32, i32) {
    %c0_i32 = arith.constant 0 : i32
    %c0_i32_0 = arith.constant 0 : i32
    return %arg0, %c0_i32, %arg1 : i32, i32, i32
  }
  func.func @transform_1(%arg0: i32, %arg1: i32) -> (i32, i32, i32) {
    %c0_i32 = arith.constant 0 : i32
    %c0_i32_0 = arith.constant 0 : i32
    return %arg0, %c0_i32, %arg1 : i32, i32, i32
  }
  func.func @transform_2(%arg0: i32, %arg1: i32) -> (i32, i32, i32) {
    %c0_i32 = arith.constant 0 : i32
    %c0_i32_0 = arith.constant 0 : i32
    return %arg0, %c0_i32, %arg1 : i32, i32, i32
  }
  func.func @transform_3(%arg0: i32, %arg1: i32) -> (i32, i32, i32) {
    %c0_i32 = arith.constant 0 : i32
    %c0_i32_0 = arith.constant 0 : i32
    %c0_i32_1 = arith.constant 0 : i32
    %c0_i32_2 = arith.constant 0 : i32
    return %c0_i32, %c0_i32_0, %c0_i32_1 : i32, i32, i32
  }
  func.func @transform_4(%arg0: i32, %arg1: i32) -> (i32, i32) {
    %c0_i32 = arith.constant 0 : i32
    %c0_i32_0 = arith.constant 0 : i32
    %c0_i32_1 = arith.constant 0 : i32
    return %c0_i32, %c0_i32_0 : i32, i32
  }
  func.func @transform_5(%arg0: i32, %arg1: i32) -> (i32, i32) {
    %c0_i32 = arith.constant 0 : i32
    %c0_i32_0 = arith.constant 0 : i32
    %c0_i32_1 = arith.constant 0 : i32
    return %c0_i32, %c0_i32_0 : i32, i32
  }
  func.func @transform_6(%arg0: i32, %arg1: i32) -> (i32, i32) {
    %c0_i32 = arith.constant 0 : i32
    %c0_i32_0 = arith.constant 0 : i32
    %c0_i32_1 = arith.constant 0 : i32
    return %c0_i32, %c0_i32_0 : i32, i32
  }
  func.func @transform_7(%arg0: i32, %arg1: i32) -> (i32, i32, i32) {
    %c0_i32 = arith.constant 0 : i32
    %c0_i32_0 = arith.constant 0 : i32
    return %arg0, %c0_i32, %arg1 : i32, i32, i32
  }
  func.func @transform_8(%arg0: i32, %arg1: i32) -> (i32, i32, i32) {
    %c0_i32 = arith.constant 0 : i32
    %c0_i32_0 = arith.constant 0 : i32
    return %arg0, %c0_i32, %arg1 : i32, i32, i32
  }
}

</mosaic_0001>

<llo_original>
// kernel: tpu_custom_call.1
$region0: #{tpu_custom_call.1}
  #allocation0 [shape = 'u32[]', space=smem, size = 0x4, offset = 0x4, fixed_abs, tag = 'smem constant byte address 0x4 - core index']
  #allocation1 [shape = 'u32[144,128]{1,0:T(1,128)}', space=vmem, size = 0x12000, scoped, tag = 'internal scratch']
  %s0 = inlined_call_operand.vmem [shape: f32[2,8,128], index: 0, kind: input, shape index: {}]
  %s1 = inlined_call_operand.vmem [shape: f32[2,8,128], index: 1, kind: input, shape index: {}]
  %s2 = inlined_call_operand.vmem [shape: f32[2,8,128], index: 2, kind: input, shape index: {}]
  %s3 = inlined_call_operand.vmem [shape: f32[3,16,8], index: 3, kind: input, shape index: {}]
  %s4 = inlined_call_operand.vmem [shape: f32[16,1], index: 4, kind: input, shape index: {}]
  %s5 = inlined_call_operand.vmem [shape: f32[16,8], index: 5, kind: input, shape index: {}]
  %s6 = inlined_call_operand.vmem [shape: f32[16,1], index: 6, kind: input, shape index: {}]
  %s7 = inlined_call_operand.hbm [shape: f32[2,8,128], index: 7, kind: output, shape index: {0}]
  %s8 = inlined_call_operand.hbm [shape: f32[2,8,128], index: 8, kind: output, shape index: {1}]
  %9 = xla_tuple %s7, %s8
  %s10 = sld [smem:[#allocation0]]
  $region69: #{tpu_custom_call.1} parent=0
    _
  %s12 = ssub.s32 1, %s10
  %s13 = scalar_select 0, %s12, %s10
  $region1: #{tpu_custom_call.1} parent=0
    #allocation2 [shape = 'u8[8192]{0}', space=vmem, size = 0x2000, scoped, tag = 'output window, operand 0']
    #allocation3 [shape = 's32[2]{0}', space=sflag, size = 0x8, scoped, tag = 'scoped memory for tpu_custom_call.1']
    #allocation4 [shape = 'u8[8192]{0}', space=vmem, size = 0x2000, scoped, tag = 'output window, operand 1']
    #allocation5 [shape = 's32[2]{0}', space=sflag, size = 0x8, scoped, tag = 'scoped memory for tpu_custom_call.1']
    %14 = vsyncpa [#allocation3], 0
    %s15 = scalar_lea.sflag [#allocation3], 1
    %16 = vsyncpa %s15, 0
    %17 = vsyncpa [#allocation5], 0
    %s18 = scalar_lea.sflag [#allocation5], 1
    %19 = vsyncpa %s18, 0
    loop: start=0, step=1, limit=4
    $region2: #{tpu_custom_call.1} parent=1 // loop_pre_header
      _
    $region3: #{tpu_custom_call.1} parent=1 // loop_header
      %s21 = sphi 0, %s25
      %p22 = scmp.ge.s32.totalorder %s21, 4
      %s28 = sphi 0, %s40
      %s29 = sphi 0, %s36
      %s30 = sphi 0, %s28
      %s31 = sphi 0, %s29
      %s32 = sphi 0, %s30
      %s33 = sphi 0, %s31
      %s45 = sphi 0, %s47
      %s48 = sphi 0, %s45
      %s49 = sphi 0, %s48
      %s65 = sphi 0, %s49
      %s73 = sphi 0, %s75
      %s76 = sphi 0, %s73
      %s77 = sphi 0, %s76
      %s93 = sphi 0, %s77
      %s101 = sphi 0, %s103
      %s104 = sphi 0, %s101
      %s105 = sphi 0, %s104
      %s121 = sphi 0, %s105
      %s125 = sphi 0, %s125
      %s127 = sphi 0, %s125
      %s128 = sphi 0, %s127
      %s142 = sphi 0, %s128
      %s146 = sphi 0, %s146
      %s148 = sphi 0, %s146
      %s149 = sphi 0, %s148
      %s163 = sphi 0, %s149
      %s167 = sphi 0, %s167
      %s169 = sphi 0, %s167
      %s170 = sphi 0, %s169
      %s184 = sphi 0, %s170
      %s188 = sphi 0, %s188
      %s190 = sphi 0, %s188
      %s191 = sphi 0, %s190
      %s205 = sphi 0, %s191
      %s213 = sphi 0, %s215
      %s216 = sphi 0, %s213
      %s217 = sphi 0, %s216
      %s233 = sphi 0, %s217
      %s241 = sphi 0, %s243
      %s244 = sphi 0, %s241
      %s245 = sphi 0, %s244
      %s261 = sphi 0, %s245
    $region4: #{tpu_custom_call.1} parent=1 // loop_header_branch
      %24 = sbr.rel (%p22) target = $region8
    $region5: #{tpu_custom_call.1} parent=1 // loop_body
      %s26 = ssub.s32 %s21, 1
      %s27 = ssub.s32 %s21, 2
      %s34 = sadd.s32 1, %s29
      %p35 = scmp.ge.s32.totalorder %s34, 1
      %s36 = scalar_select %p35, 0, %s34
      %s37 = sadd.s32 1, %s28
      %s38 = scalar_select %p35, %s37, %s28
      %p39 = scmp.ge.s32.totalorder %s38, 2
      %s40 = scalar_select %p39, 0, %s38
      %s41 = ssub.s32 %s28, %s40
      %s42 = ssub.s32 %s29, %s36
      %s43 = sor.u32 %s41, %s42
      %p44 = scmp.eq.s32.totalorder %s43, 0
      %s46 = sadd.s32 %s45, 1
      %s47 = scalar_select %p44, %s45, %s46
      %p50 = pneg %p44
      %p51 = scmp.eq.s32.totalorder %s21, 1
      %p52 = por %p50, %p51
      %p53 = scmp.ne.s32.totalorder %s45, %s48
      %p54 = scmp.eq.s32.totalorder %s21, 0
      %p55 = por %p53, %p54
      %p56 = scmp.ne.s32.totalorder %s45, %s48
      %p57 = scmp.eq.s32.totalorder %s26, 1
      %p58 = por %p56, %p57
      %p59 = scmp.ne.s32.totalorder %s48, %s49
      %p60 = scmp.eq.s32.totalorder %s26, 0
      %p61 = por %p59, %p60
      %p62 = scmp.ne.s32.totalorder %s48, %s49
      %p63 = scmp.eq.s32.totalorder %s27, 1
      %p64 = por %p62, %p63
      %p66 = scmp.ne.s32.totalorder %s49, %s65
      %p67 = scmp.eq.s32.totalorder %s27, 0
      %p68 = por %p66, %p67
      %s69 = ssub.s32 %s28, %s40
      %s70 = ssub.s32 %s29, %s36
      %s71 = sor.u32 %s69, %s70
      %p72 = scmp.eq.s32.totalorder %s71, 0
      %s74 = sadd.s32 %s73, 1
      %s75 = scalar_select %p72, %s73, %s74
      %p78 = pneg %p72
      %p79 = scmp.eq.s32.totalorder %s21, 1
      %p80 = por %p78, %p79
      %p81 = scmp.ne.s32.totalorder %s73, %s76
      %p82 = scmp.eq.s32.totalorder %s21, 0
      %p83 = por %p81, %p82
      %p84 = scmp.ne.s32.totalorder %s73, %s76
      %p85 = scmp.eq.s32.totalorder %s26, 1
      %p86 = por %p84, %p85
      %p87 = scmp.ne.s32.totalorder %s76, %s77
      %p88 = scmp.eq.s32.totalorder %s26, 0
      %p89 = por %p87, %p88
      %p90 = scmp.ne.s32.totalorder %s76, %s77
      %p91 = scmp.eq.s32.totalorder %s27, 1
      %p92 = por %p90, %p91
      %p94 = scmp.ne.s32.totalorder %s77, %s93
      %p95 = scmp.eq.s32.totalorder %s27, 0
      %p96 = por %p94, %p95
      %s97 = ssub.s32 %s28, %s40
      %s98 = ssub.s32 %s29, %s36
      %s99 = sor.u32 %s97, %s98
      %p100 = scmp.eq.s32.totalorder %s99, 0
      %s102 = sadd.s32 %s101, 1
      %s103 = scalar_select %p100, %s101, %s102
      %p106 = pneg %p100
      %p107 = scmp.eq.s32.totalorder %s21, 1
      %p108 = por %p106, %p107
      %p109 = scmp.ne.s32.totalorder %s101, %s104
      %p110 = scmp.eq.s32.totalorder %s21, 0
      %p111 = por %p109, %p110
      %p112 = scmp.ne.s32.totalorder %s101, %s104
      %p113 = scmp.eq.s32.totalorder %s26, 1
      %p114 = por %p112, %p113
      %p115 = scmp.ne.s32.totalorder %s104, %s105
      %p116 = scmp.eq.s32.totalorder %s26, 0
      %p117 = por %p115, %p116
      %p118 = scmp.ne.s32.totalorder %s104, %s105
      %p119 = scmp.eq.s32.totalorder %s27, 1
      %p120 = por %p118, %p119
      %p122 = scmp.ne.s32.totalorder %s105, %s121
      %p123 = scmp.eq.s32.totalorder %s27, 0
      %p124 = por %p122, %p123
      %s126 = sadd.s32 %s125, 1
      %p129 = scmp.eq.s32.totalorder %s21, 1
      %p130 = scmp.ne.s32.totalorder %s125, %s127
      %p131 = scmp.eq.s32.totalorder %s21, 0
      %p132 = por %p130, %p131
      %p133 = scmp.ne.s32.totalorder %s125, %s127
      %p134 = scmp.eq.s32.totalorder %s26, 1
      %p135 = por %p133, %p134
      %p136 = scmp.ne.s32.totalorder %s127, %s128
      %p137 = scmp.eq.s32.totalorder %s26, 0
      %p138 = por %p136, %p137
      %p139 = scmp.ne.s32.totalorder %s127, %s128
      %p140 = scmp.eq.s32.totalorder %s27, 1
      %p141 = por %p139, %p140
      %p143 = scmp.ne.s32.totalorder %s128, %s142
      %p144 = scmp.eq.s32.totalorder %s27, 0
      %p145 = por %p143, %p144
      %s147 = sadd.s32 %s146, 1
      %p150 = scmp.eq.s32.totalorder %s21, 1
      %p151 = scmp.ne.s32.totalorder %s146, %s148
      %p152 = scmp.eq.s32.totalorder %s21, 0
      %p153 = por %p151, %p152
      %p154 = scmp.ne.s32.totalorder %s146, %s148
      %p155 = scmp.eq.s32.totalorder %s26, 1
      %p156 = por %p154, %p155
      %p157 = scmp.ne.s32.totalorder %s148, %s149
      %p158 = scmp.eq.s32.totalorder %s26, 0
      %p159 = por %p157, %p158
      %p160 = scmp.ne.s32.totalorder %s148, %s149
      %p161 = scmp.eq.s32.totalorder %s27, 1
      %p162 = por %p160, %p161
      %p164 = scmp.ne.s32.totalorder %s149, %s163
      %p165 = scmp.eq.s32.totalorder %s27, 0
      %p166 = por %p164, %p165
      %s168 = sadd.s32 %s167, 1
      %p171 = scmp.eq.s32.totalorder %s21, 1
      %p172 = scmp.ne.s32.totalorder %s167, %s169
      %p173 = scmp.eq.s32.totalorder %s21, 0
      %p174 = por %p172, %p173
      %p175 = scmp.ne.s32.totalorder %s167, %s169
      %p176 = scmp.eq.s32.totalorder %s26, 1
      %p177 = por %p175, %p176
      %p178 = scmp.ne.s32.totalorder %s169, %s170
      %p179 = scmp.eq.s32.totalorder %s26, 0
      %p180 = por %p178, %p179
      %p181 = scmp.ne.s32.totalorder %s169, %s170
      %p182 = scmp.eq.s32.totalorder %s27, 1
      %p183 = por %p181, %p182
      %p185 = scmp.ne.s32.totalorder %s170, %s184
      %p186 = scmp.eq.s32.totalorder %s27, 0
      %p187 = por %p185, %p186
      %s189 = sadd.s32 %s188, 1
      %p192 = scmp.eq.s32.totalorder %s21, 1
      %p193 = scmp.ne.s32.totalorder %s188, %s190
      %p194 = scmp.eq.s32.totalorder %s21, 0
      %p195 = por %p193, %p194
      %p196 = scmp.ne.s32.totalorder %s188, %s190
      %p197 = scmp.eq.s32.totalorder %s26, 1
      %p198 = por %p196, %p197
      %p199 = scmp.ne.s32.totalorder %s190, %s191
      %p200 = scmp.eq.s32.totalorder %s26, 0
      %p201 = por %p199, %p200
      %p202 = scmp.ne.s32.totalorder %s190, %s191
      %p203 = scmp.eq.s32.totalorder %s27, 1
      %p204 = por %p202, %p203
      %p206 = scmp.ne.s32.totalorder %s191, %s205
      %p207 = scmp.eq.s32.totalorder %s27, 0
      %p208 = por %p206, %p207
      %s209 = ssub.s32 %s28, %s40
      %s210 = ssub.s32 %s29, %s36
      %s211 = sor.u32 %s209, %s210
      %p212 = scmp.eq.s32.totalorder %s211, 0
      %s214 = sadd.s32 %s213, 1
      %s215 = scalar_select %p212, %s213, %s214
      %p218 = pneg %p212
      %p219 = scmp.eq.s32.totalorder %s21, 1
      %p220 = por %p218, %p219
      %p221 = scmp.ne.s32.totalorder %s213, %s216
      %p222 = scmp.eq.s32.totalorder %s21, 0
      %p223 = por %p221, %p222
      %p224 = scmp.ne.s32.totalorder %s213, %s216
      %p225 = scmp.eq.s32.totalorder %s26, 1
      %p226 = por %p224, %p225
      %p227 = scmp.ne.s32.totalorder %s216, %s217
      %p228 = scmp.eq.s32.totalorder %s26, 0
      %p229 = por %p227, %p228
      %p230 = scmp.ne.s32.totalorder %s216, %s217
      %p231 = scmp.eq.s32.totalorder %s27, 1
      %p232 = por %p230, %p231
      %p234 = scmp.ne.s32.totalorder %s217, %s233
      %p235 = scmp.eq.s32.totalorder %s27, 0
      %p236 = por %p234, %p235
      %s237 = ssub.s32 %s28, %s40
      %s238 = ssub.s32 %s29, %s36
      %s239 = sor.u32 %s237, %s238
      %p240 = scmp.eq.s32.totalorder %s239, 0
      %s242 = sadd.s32 %s241, 1
      %s243 = scalar_select %p240, %s241, %s242
      %p246 = pneg %p240
      %p247 = scmp.eq.s32.totalorder %s21, 1
      %p248 = por %p246, %p247
      %p249 = scmp.ne.s32.totalorder %s241, %s244
      %p250 = scmp.eq.s32.totalorder %s21, 0
      %p251 = por %p249, %p250
      %p252 = scmp.ne.s32.totalorder %s241, %s244
      %p253 = scmp.eq.s32.totalorder %s26, 1
      %p254 = por %p252, %p253
      %p255 = scmp.ne.s32.totalorder %s244, %s245
      %p256 = scmp.eq.s32.totalorder %s26, 0
      %p257 = por %p255, %p256
      %p258 = scmp.ne.s32.totalorder %s244, %s245
      %p259 = scmp.eq.s32.totalorder %s27, 1
      %p260 = por %p258, %p259
      %p262 = scmp.ne.s32.totalorder %s245, %s261
      %p263 = scmp.eq.s32.totalorder %s27, 0
      %p264 = por %p262, %p263
      %p265 = scmp.le.s32.totalorder 1, %s21
      %p266 = scmp.lt.s32.totalorder %s21, 3
      %p267 = pnand %p265, %p266
      %p268 = pneg %p267
      // Predicated region
      $region9: #{tpu_custom_call.1} parent=5 // pred_check
        _
      $region10: #{tpu_custom_call.1} parent=5 // pred_check_branch
        %270 = sbr.rel (%p267) target = $region12
      $region11: #{tpu_custom_call.1} parent=5 // pred_region
        %s271 = ssub.s32 %s21, 1
        // Predicated region
        $region13: #{tpu_custom_call.1} parent=11 // pred_check
          %p272 = pneg %p138
        $region14: #{tpu_custom_call.1} parent=11 // pred_check_branch
          %274 = sbr.rel (%p272) target = $region16
        $region15: #{tpu_custom_call.1} parent=11 // pred_region
          _
        $region16: #{tpu_custom_call.1} parent=11 // pred_fallthru
          _
        // Predicated region
        $region17: #{tpu_custom_call.1} parent=11 // pred_check
          %p275 = pneg %p159
        $region18: #{tpu_custom_call.1} parent=11 // pred_check_branch
          %277 = sbr.rel (%p275) target = $region20
        $region19: #{tpu_custom_call.1} parent=11 // pred_region
          _
        $region20: #{tpu_custom_call.1} parent=11 // pred_fallthru
          _
        // Predicated region
        $region21: #{tpu_custom_call.1} parent=11 // pred_check
          %p278 = pneg %p180
        $region22: #{tpu_custom_call.1} parent=11 // pred_check_branch
          %280 = sbr.rel (%p278) target = $region24
        $region23: #{tpu_custom_call.1} parent=11 // pred_region
          _
        $region24: #{tpu_custom_call.1} parent=11 // pred_fallthru
          _
        // Predicated region
        $region25: #{tpu_custom_call.1} parent=11 // pred_check
          %p281 = pneg %p201
        $region26: #{tpu_custom_call.1} parent=11 // pred_check_branch
          %283 = sbr.rel (%p281) target = $region28
        $region27: #{tpu_custom_call.1} parent=11 // pred_region
          _
        $region28: #{tpu_custom_call.1} parent=11 // pred_fallthru
          _
      $region12: #{tpu_custom_call.1} parent=5 // pred_fallthru
        _
      %p284 = scmp.lt.s32.totalorder %s21, 2
      // Predicated region
      $region29: #{tpu_custom_call.1} parent=5 // pred_check
        %p285 = pneg %p284
      $region30: #{tpu_custom_call.1} parent=5 // pred_check_branch
        %287 = sbr.rel (%p285) target = $region32
      $region31: #{tpu_custom_call.1} parent=5 // pred_region
        // Predicated region
        $region33: #{tpu_custom_call.1} parent=31 // pred_check
          %p288 = pneg %p55
        $region34: #{tpu_custom_call.1} parent=31 // pred_check_branch
          %290 = sbr.rel (%p288) target = $region36
        $region35: #{tpu_custom_call.1} parent=31 // pred_region
          %p291 = scmp.lt.s32.totalorder %s28, 1
          %s292 = scalar_select %p291, %s28, 1
          %p293 = scmp.lt.s32.totalorder %s29, 0
          %s294 = scalar_select %p293, %s29, 0
          %s295 = sadd.s32 %s294, %s292
          %s296 = smul.addr %s295, 8
          %s297 = scalar_lea.vmem %s0, %s296
        $region36: #{tpu_custom_call.1} parent=31 // pred_fallthru
          _
        // Predicated region
        $region37: #{tpu_custom_call.1} parent=31 // pred_check
          %p298 = pneg %p83
        $region38: #{tpu_custom_call.1} parent=31 // pred_check_branch
          %300 = sbr.rel (%p298) target = $region40
        $region39: #{tpu_custom_call.1} parent=31 // pred_region
          %p301 = scmp.lt.s32.totalorder %s28, 1
          %s302 = scalar_select %p301, %s28, 1
          %p303 = scmp.lt.s32.totalorder %s29, 0
          %s304 = scalar_select %p303, %s29, 0
          %s305 = sadd.s32 %s304, %s302
          %s306 = smul.addr %s305, 8
          %s307 = scalar_lea.vmem %s1, %s306
        $region40: #{tpu_custom_call.1} parent=31 // pred_fallthru
          _
        // Predicated region
        $region41: #{tpu_custom_call.1} parent=31 // pred_check
          %p308 = pneg %p111
        $region42: #{tpu_custom_call.1} parent=31 // pred_check_branch
          %310 = sbr.rel (%p308) target = $region44
        $region43: #{tpu_custom_call.1} parent=31 // pred_region
          %p311 = scmp.lt.s32.totalorder %s28, 1
          %s312 = scalar_select %p311, %s28, 1
          %p313 = scmp.lt.s32.totalorder %s29, 0
          %s314 = scalar_select %p313, %s29, 0
          %s315 = sadd.s32 %s314, %s312
          %s316 = smul.addr %s315, 8
          %s317 = scalar_lea.vmem %s2, %s316
        $region44: #{tpu_custom_call.1} parent=31 // pred_fallthru
          _
      $region32: #{tpu_custom_call.1} parent=5 // pred_fallthru
        _
      %p318 = scmp.le.s32.totalorder 1, %s21
      %p319 = scmp.lt.s32.totalorder %s21, 3
      %p320 = pnand %p318, %p319
      %p321 = pneg %p320
      // Predicated region
      $region45: #{tpu_custom_call.1} parent=5 // pred_check
        _
      $region46: #{tpu_custom_call.1} parent=5 // pred_check_branch
        %323 = sbr.rel (%p320) target = $region48
      $region47: #{tpu_custom_call.1} parent=5 // pred_region
        %s324 = ssub.s32 %s21, 1
        %p325 = scmp.lt.s32.totalorder %s30, 1
        %s326 = scalar_select %p325, %s30, 1
        %p327 = scmp.lt.s32.totalorder %s31, 0
        %s328 = scalar_select %p327, %s31, 0
        %s329 = sadd.s32 %s328, %s326
        %s330 = smul.addr %s329, 8
        %s331 = scalar_lea.vmem %s0, %s330
        %p332 = pneg %p61
        %p333 = pneg %p58
        %p334 = scmp.lt.s32.totalorder %s30, 1
        %s335 = scalar_select %p334, %s30, 1
        %p336 = scmp.lt.s32.totalorder %s31, 0
        %s337 = scalar_select %p336, %s31, 0
        %s338 = sadd.s32 %s337, %s335
        %s339 = smul.addr %s338, 8
        %s340 = scalar_lea.vmem %s1, %s339
        %p341 = pneg %p89
        %p342 = pneg %p86
        %p343 = scmp.lt.s32.totalorder %s30, 1
        %s344 = scalar_select %p343, %s30, 1
        %p345 = scmp.lt.s32.totalorder %s31, 0
        %s346 = scalar_select %p345, %s31, 0
        %s347 = sadd.s32 %s346, %s344
        %s348 = smul.addr %s347, 8
        %s349 = scalar_lea.vmem %s2, %s348
        %p350 = pneg %p117
        %p351 = pneg %p114
        %p352 = pneg %p138
        %p353 = pneg %p135
        %p354 = pneg %p159
        %p355 = pneg %p156
        %p356 = pneg %p180
        %p357 = pneg %p177
        %p358 = pneg %p201
        %p359 = pneg %p198
        %p360 = pneg %p229
        %p361 = pneg %p226
        %s362 = sand.u32 %s216, 1
        %s363 = scalar_lea.sflag [#allocation3], %s362
        %s364 = sand.u32 %s216, 1
        %s365 = smul.addr %s364, 8
        %s366 = scalar_lea.vmem [#allocation2], %s365
        %p367 = pneg %p257
        %p368 = pneg %p254
        %s369 = sand.u32 %s244, 1
        %s370 = scalar_lea.sflag [#allocation5], %s369
        %s371 = sand.u32 %s244, 1
        %s372 = smul.addr %s371, 8
        %s373 = scalar_lea.vmem [#allocation4], %s372
        %p374 = scmp.lt.s32.totalorder %s30, 1
        %s375 = scalar_select %p374, %s30, 1
        %p376 = scmp.lt.s32.totalorder %s31, 0
        %s377 = scalar_select %p376, %s31, 0
        %s378 = sadd.s32 %s377, %s375
        %s379 = smul.addr %s378, 8
        %s380 = scalar_lea.vmem %s0, %s379
        %p381 = scmp.lt.s32.totalorder %s30, 1
        %s382 = scalar_select %p381, %s30, 1
        %p383 = scmp.lt.s32.totalorder %s31, 0
        %s384 = scalar_select %p383, %s31, 0
        %s385 = sadd.s32 %s384, %s382
        %s386 = smul.addr %s385, 8
        %s387 = scalar_lea.vmem %s1, %s386
        %p388 = scmp.lt.s32.totalorder %s30, 1
        %s389 = scalar_select %p388, %s30, 1
        %p390 = scmp.lt.s32.totalorder %s31, 0
        %s391 = scalar_select %p390, %s31, 0
        %s392 = sadd.s32 %s391, %s389
        %s393 = smul.addr %s392, 8
        %s394 = scalar_lea.vmem %s2, %s393
        %v395 = vld [vmem:[%s3] sm:$0xff]
        %v396 = vld [vmem:[%s3 + $0x8] sm:$0xff]
        %v397 = vld [vmem:[%s380] sm:$0xff]
        %s398 = scalar_lea.vmem %s3, 16
        %v399 = vld [vmem:[%s398] sm:$0xff]
        %v400 = vld [vmem:[%s398 + $0x8] sm:$0xff]
        %v401 = vld [vmem:[%s387] sm:$0xff]
        %vm402 = vcmask 64512
        %v404 = vsel %vm402, %v399, 0
        %v407 = vsel %vm402, %v400, 0
        %409 = vmatprep.subr.mxu0 0.0
        %410 = vmatpush1.msra.mxu0 %v401
        %411 = vmatprep.subr.mxu0 0.0
        %412 = vmatpush1.msra.mxu0 0.0
        %413 = vmatprep.subr.mxu0 0.0
        %414 = vmatpush1.msra.mxu0 0.0
        %415 = vmatprep.subr.mxu0 0.0
        %416 = vmatpush1.msra.mxu0 0.0
        %417 = vmatprep.subr.mxu0 0.0
        %418 = vmatpush1.msra.mxu0 0.0
        %419 = vmatprep.subr.mxu0 0.0
        %420 = vmatpush1.msra.mxu0 0.0
        %421 = vmatprep.subr.mxu0 0.0
        %422 = vmatpush1.msra.mxu0 0.0
        %423 = vmatprep.subr.mxu0 0.0
        %424 = vmatpush1.msra.mxu0 0.0
        %425 = vmatprep.subr.mxu0 0.0
        %426 = vmatpush1.msra.mxu0 0.0
        %427 = vmatprep.subr.mxu0 0.0
        %428 = vmatpush1.msra.mxu0 0.0
        %429 = vmatprep.subr.mxu0 0.0
        %430 = vmatpush1.msra.mxu0 0.0
        %431 = vmatprep.subr.mxu0 0.0
        %432 = vmatpush1.msra.mxu0 0.0
        %433 = vmatprep.subr.mxu0 0.0
        %434 = vmatpush1.msra.mxu0 0.0
        %435 = vmatprep.subr.mxu0 0.0
        %436 = vmatpush1.msra.mxu0 0.0
        %437 = vmatprep.subr.mxu0 0.0
        %438 = vmatpush1.msra.mxu0 0.0
        %439 = vmatprep.subr.mxu0 0.0
        %440 = vmatpush1.msra.mxu0 0.0
        %441 = vmatprep.subr.mxu0 0.0
        %442 = vmatpush1.msra.mxu0 0.0
        %443 = vmatprep.subr.mxu0 0.0
        %444 = vmatpush1.msra.mxu0 0.0
        %445 = vmatprep.subr.mxu0 0.0
        %446 = vmatpush1.msra.mxu0 0.0
        %447 = vmatprep.subr.mxu0 0.0
        %448 = vmatpush1.msra.mxu0 0.0
        %449 = vmatprep.subr.mxu0 0.0
        %450 = vmatpush1.msra.mxu0 0.0
        %451 = vmatprep.subr.mxu0 0.0
        %452 = vmatpush1.msra.mxu0 0.0
        %453 = vmatprep.subr.mxu0 0.0
        %454 = vmatpush1.msra.mxu0 0.0
        %455 = vmatprep.subr.mxu0 0.0
        %456 = vmatpush1.msra.mxu0 0.0
        %457 = vmatprep.subr.mxu0 0.0
        %458 = vmatpush1.msra.mxu0 0.0
        %459 = vmatprep.subr.mxu0 0.0
        %460 = vmatpush1.msra.mxu0 0.0
        %461 = vmatprep.subr.mxu0 0.0
        %462 = vmatpush1.msra.mxu0 0.0
        %463 = vmatprep.subr.mxu0 0.0
        %464 = vmatpush1.msra.mxu0 0.0
        %465 = vmatprep.subr.mxu0 0.0
        %466 = vmatpush1.msra.mxu0 0.0
        %467 = vmatprep.subr.mxu0 0.0
        %468 = vmatpush1.msra.mxu0 0.0
        %469 = vmatprep.subr.mxu0 0.0
        %470 = vmatpush1.msra.mxu0 0.0
        %471 = vmatprep.subr.mxu0 0.0
        %472 = vmatpush1.msra.mxu0 0.0
        %473 = vmatprep.mubr.f32.mxu0 0.0
        %474 = vmatmul.mubr.f32.gmra.mrb[0].mxu0 %v404
        %v475 = vpop.f32.mrb[0].mxu0
        %v476 = vadd.f32 0.0, %v475
        %v477 = vpop.f32.mrb[0].mxu0
        %478 = vmatprep.mubr.f32.mxu0 0.0
        %479 = vmatmul.mubr.f32.gmra.mrb[0].mxu0 %v407
        %v480 = vpop.f32.mrb[0].mxu0
        %v481 = vadd.f32 0.0, %v480
        %v482 = vpop.f32.mrb[0].mxu0
        %483 = vdwg.mxu0
        %v485 = vsel %vm402, %v395, 0
        %v488 = vsel %vm402, %v396, 0
        %490 = vmatprep.subr.mxu0 0.0
        %491 = vmatpush1.msra.mxu0 %v397
        %492 = vmatprep.subr.mxu0 0.0
        %493 = vmatpush1.msra.mxu0 0.0
        %494 = vmatprep.subr.mxu0 0.0
        %495 = vmatpush1.msra.mxu0 0.0
        %496 = vmatprep.subr.mxu0 0.0
        %497 = vmatpush1.msra.mxu0 0.0
        %498 = vmatprep.subr.mxu0 0.0
        %499 = vmatpush1.msra.mxu0 0.0
        %500 = vmatprep.subr.mxu0 0.0
        %501 = vmatpush1.msra.mxu0 0.0
        %502 = vmatprep.subr.mxu0 0.0
        %503 = vmatpush1.msra.mxu0 0.0
        %504 = vmatprep.subr.mxu0 0.0
        %505 = vmatpush1.msra.mxu0 0.0
        %506 = vmatprep.subr.mxu0 0.0
        %507 = vmatpush1.msra.mxu0 0.0
        %508 = vmatprep.subr.mxu0 0.0
        %509 = vmatpush1.msra.mxu0 0.0
        %510 = vmatprep.subr.mxu0 0.0
        %511 = vmatpush1.msra.mxu0 0.0
        %512 = vmatprep.subr.mxu0 0.0
        %513 = vmatpush1.msra.mxu0 0.0
        %514 = vmatprep.subr.mxu0 0.0
        %515 = vmatpush1.msra.mxu0 0.0
        %516 = vmatprep.subr.mxu0 0.0
        %517 = vmatpush1.msra.mxu0 0.0
        %518 = vmatprep.subr.mxu0 0.0
        %519 = vmatpush1.msra.mxu0 0.0
        %520 = vmatprep.subr.mxu0 0.0
        %521 = vmatpush1.msra.mxu0 0.0
        %522 = vmatprep.subr.mxu0 0.0
        %523 = vmatpush1.msra.mxu0 0.0
        %524 = vmatprep.subr.mxu0 0.0
        %525 = vmatpush1.msra.mxu0 0.0
        %526 = vmatprep.subr.mxu0 0.0
        %527 = vmatpush1.msra.mxu0 0.0
        %528 = vmatprep.subr.mxu0 0.0
        %529 = vmatpush1.msra.mxu0 0.0
        %530 = vmatprep.subr.mxu0 0.0
        %531 = vmatpush1.msra.mxu0 0.0
        %532 = vmatprep.subr.mxu0 0.0
        %533 = vmatpush1.msra.mxu0 0.0
        %534 = vmatprep.subr.mxu0 0.0
        %535 = vmatpush1.msra.mxu0 0.0
        %536 = vmatprep.subr.mxu0 0.0
        %537 = vmatpush1.msra.mxu0 0.0
        %538 = vmatprep.subr.mxu0 0.0
        %539 = vmatpush1.msra.mxu0 0.0
        %540 = vmatprep.subr.mxu0 0.0
        %541 = vmatpush1.msra.mxu0 0.0
        %542 = vmatprep.subr.mxu0 0.0
        %543 = vmatpush1.msra.mxu0 0.0
        %544 = vmatprep.subr.mxu0 0.0
        %545 = vmatpush1.msra.mxu0 0.0
        %546 = vmatprep.subr.mxu0 0.0
        %547 = vmatpush1.msra.mxu0 0.0
        %548 = vmatprep.subr.mxu0 0.0
        %549 = vmatpush1.msra.mxu0 0.0
        %550 = vmatprep.subr.mxu0 0.0
        %551 = vmatpush1.msra.mxu0 0.0
        %552 = vmatprep.subr.mxu0 0.0
        %553 = vmatpush1.msra.mxu0 0.0
        %554 = vmatprep.mubr.f32.mxu0 0.0
        %555 = vmatmul.mubr.f32.gmra.mrb[0].mxu0 %v485
        %v556 = vpop.f32.mrb[0].mxu0
        %v557 = vadd.f32 %v476, %v556
        %v558 = vpop.f32.mrb[0].mxu0
        %559 = vmatprep.mubr.f32.mxu0 0.0
        %560 = vmatmul.mubr.f32.gmra.mrb[0].mxu0 %v488
        %v561 = vpop.f32.mrb[0].mxu0
        %v562 = vadd.f32 %v481, %v561
        %v563 = vpop.f32.mrb[0].mxu0
        %564 = vdwg.mxu0
        %s565 = scalar_lea.vmem %s3, 32
        %v566 = vld [vmem:[%s565] sm:$0xff]
        %v567 = vld [vmem:[%s565 + $0x8] sm:$0xff]
        %v568 = vld [vmem:[%s394] sm:$0xff]
        %v570 = vsel %vm402, %v566, 0
        %v573 = vsel %vm402, %v567, 0
        %575 = vmatprep.subr.mxu0 0.0
        %576 = vmatpush1.msra.mxu0 %v568
        %577 = vmatprep.subr.mxu0 0.0
        %578 = vmatpush1.msra.mxu0 0.0
        %579 = vmatprep.subr.mxu0 0.0
        %580 = vmatpush1.msra.mxu0 0.0
        %581 = vmatprep.subr.mxu0 0.0
        %582 = vmatpush1.msra.mxu0 0.0
        %583 = vmatprep.subr.mxu0 0.0
        %584 = vmatpush1.msra.mxu0 0.0
        %585 = vmatprep.subr.mxu0 0.0
        %586 = vmatpush1.msra.mxu0 0.0
        %587 = vmatprep.subr.mxu0 0.0
        %588 = vmatpush1.msra.mxu0 0.0
        %589 = vmatprep.subr.mxu0 0.0
        %590 = vmatpush1.msra.mxu0 0.0
        %591 = vmatprep.subr.mxu0 0.0
        %592 = vmatpush1.msra.mxu0 0.0
        %593 = vmatprep.subr.mxu0 0.0
        %594 = vmatpush1.msra.mxu0 0.0
        %595 = vmatprep.subr.mxu0 0.0
        %596 = vmatpush1.msra.mxu0 0.0
        %597 = vmatprep.subr.mxu0 0.0
        %598 = vmatpush1.msra.mxu0 0.0
        %599 = vmatprep.subr.mxu0 0.0
        %600 = vmatpush1.msra.mxu0 0.0
        %601 = vmatprep.subr.mxu0 0.0
        %602 = vmatpush1.msra.mxu0 0.0
        %603 = vmatprep.subr.mxu0 0.0
        %604 = vmatpush1.msra.mxu0 0.0
        %605 = vmatprep.subr.mxu0 0.0
        %606 = vmatpush1.msra.mxu0 0.0
        %607 = vmatprep.subr.mxu0 0.0
        %608 = vmatpush1.msra.mxu0 0.0
        %609 = vmatprep.subr.mxu0 0.0
        %610 = vmatpush1.msra.mxu0 0.0
        %611 = vmatprep.subr.mxu0 0.0
        %612 = vmatpush1.msra.mxu0 0.0
        %613 = vmatprep.subr.mxu0 0.0
        %614 = vmatpush1.msra.mxu0 0.0
        %615 = vmatprep.subr.mxu0 0.0
        %616 = vmatpush1.msra.mxu0 0.0
        %617 = vmatprep.subr.mxu0 0.0
        %618 = vmatpush1.msra.mxu0 0.0
        %619 = vmatprep.subr.mxu0 0.0
        %620 = vmatpush1.msra.mxu0 0.0
        %621 = vmatprep.subr.mxu0 0.0
        %622 = vmatpush1.msra.mxu0 0.0
        %623 = vmatprep.subr.mxu0 0.0
        %624 = vmatpush1.msra.mxu0 0.0
        %625 = vmatprep.subr.mxu0 0.0
        %626 = vmatpush1.msra.mxu0 0.0
        %627 = vmatprep.subr.mxu0 0.0
        %628 = vmatpush1.msra.mxu0 0.0
        %629 = vmatprep.subr.mxu0 0.0
        %630 = vmatpush1.msra.mxu0 0.0
        %631 = vmatprep.subr.mxu0 0.0
        %632 = vmatpush1.msra.mxu0 0.0
        %633 = vmatprep.subr.mxu0 0.0
        %634 = vmatpush1.msra.mxu0 0.0
        %635 = vmatprep.subr.mxu0 0.0
        %636 = vmatpush1.msra.mxu0 0.0
        %637 = vmatprep.subr.mxu0 0.0
        %638 = vmatpush1.msra.mxu0 0.0
        %639 = vmatprep.mubr.f32.mxu0 0.0
        %640 = vmatmul.mubr.f32.gmra.mrb[0].mxu0 %v570
        %v641 = vpop.f32.mrb[0].mxu0
        %v642 = vadd.f32 0.0, %v641
        %v643 = vpop.f32.mrb[0].mxu0
        %644 = vmatprep.mubr.f32.mxu0 0.0
        %645 = vmatmul.mubr.f32.gmra.mrb[0].mxu0 %v573
        %v646 = vpop.f32.mrb[0].mxu0
        %v647 = vadd.f32 0.0, %v646
        %v648 = vpop.f32.mrb[0].mxu0
        %649 = vdwg.mxu0
        %v650 = vadd.f32 %v557, %v642
        %v651 = vadd.f32 %v562, %v647
        %v652 = vld [vmem:[%s4] sm:$0xff]
        %v653 = vld [vmem:[%s4 + $0x8] sm:$0xff]
        %655 = vset.pattern.permute.xlu0 0
        %656 = vperm.xlu0 %655, %v652
        %v657 = vpop.permute.xlu0 %656
        %660 = vset.pattern.permute.xlu0 0
        %661 = vperm.xlu0 %660, %v653
        %v662 = vpop.permute.xlu0 %661
        %v664 = vadd.f32 %v650, %v657
        %v665 = vadd.f32 %v651, %v662
        %v666 = vtanh.pop %v664
        %v667 = vxor.u32 %v665, 2147483648
        %v668 = vmul.f32 %v667, 1.442695
        %v669 = vpow.pop %v668
        %v670 = vadd.f32 %v669, 1.0
        %v671 = vrcp.pop %v670
        %v672 = vmul.f32 1.0, %v671
        %v673 = vmul.f32 %v666, %v672
        %v674 = vld [vmem:[%s5] sm:$0xff]
        %v675 = vld [vmem:[%s5 + $0x8] sm:$0xff]
        %v676 = vld [vmem:[%s6] sm:$0xff]
        %v677 = vld [vmem:[%s6 + $0x8] sm:$0xff]
        %679 = vset.pattern.permute.xlu0 0
        %680 = vperm.xlu0 %679, %v676
        %v681 = vpop.permute.xlu0 %680
        %684 = vset.pattern.permute.xlu0 0
        %685 = vperm.xlu0 %684, %v677
        %v686 = vpop.permute.xlu0 %685
        %v689 = vsel %vm402, %v674, 0
        %v692 = vsel %vm402, %v675, 0
        %694 = vmatprep.subr.mxu0 0.0
        %695 = vmatpush1.msra.mxu0 %v673
        %696 = vmatprep.subr.mxu0 0.0
        %697 = vmatpush1.msra.mxu0 0.0
        %698 = vmatprep.subr.mxu0 0.0
        %699 = vmatpush1.msra.mxu0 0.0
        %700 = vmatprep.subr.mxu0 0.0
        %701 = vmatpush1.msra.mxu0 0.0
        %702 = vmatprep.subr.mxu0 0.0
        %703 = vmatpush1.msra.mxu0 0.0
        %704 = vmatprep.subr.mxu0 0.0
        %705 = vmatpush1.msra.mxu0 0.0
        %706 = vmatprep.subr.mxu0 0.0
        %707 = vmatpush1.msra.mxu0 0.0
        %708 = vmatprep.subr.mxu0 0.0
        %709 = vmatpush1.msra.mxu0 0.0
        %710 = vmatprep.subr.mxu0 0.0
        %711 = vmatpush1.msra.mxu0 0.0
        %712 = vmatprep.subr.mxu0 0.0
        %713 = vmatpush1.msra.mxu0 0.0
        %714 = vmatprep.subr.mxu0 0.0
        %715 = vmatpush1.msra.mxu0 0.0
        %716 = vmatprep.subr.mxu0 0.0
        %717 = vmatpush1.msra.mxu0 0.0
        %718 = vmatprep.subr.mxu0 0.0
        %719 = vmatpush1.msra.mxu0 0.0
        %720 = vmatprep.subr.mxu0 0.0
        %721 = vmatpush1.msra.mxu0 0.0
        %722 = vmatprep.subr.mxu0 0.0
        %723 = vmatpush1.msra.mxu0 0.0
        %724 = vmatprep.subr.mxu0 0.0
        %725 = vmatpush1.msra.mxu0 0.0
        %726 = vmatprep.subr.mxu0 0.0
        %727 = vmatpush1.msra.mxu0 0.0
        %728 = vmatprep.subr.mxu0 0.0
        %729 = vmatpush1.msra.mxu0 0.0
        %730 = vmatprep.subr.mxu0 0.0
        %731 = vmatpush1.msra.mxu0 0.0
        %732 = vmatprep.subr.mxu0 0.0
        %733 = vmatpush1.msra.mxu0 0.0
        %734 = vmatprep.subr.mxu0 0.0
        %735 = vmatpush1.msra.mxu0 0.0
        %736 = vmatprep.subr.mxu0 0.0
        %737 = vmatpush1.msra.mxu0 0.0
        %738 = vmatprep.subr.mxu0 0.0
        %739 = vmatpush1.msra.mxu0 0.0
        %740 = vmatprep.subr.mxu0 0.0
        %741 = vmatpush1.msra.mxu0 0.0
        %742 = vmatprep.subr.mxu0 0.0
        %743 = vmatpush1.msra.mxu0 0.0
        %744 = vmatprep.subr.mxu0 0.0
        %745 = vmatpush1.msra.mxu0 0.0
        %746 = vmatprep.subr.mxu0 0.0
        %747 = vmatpush1.msra.mxu0 0.0
        %748 = vmatprep.subr.mxu0 0.0
        %749 = vmatpush1.msra.mxu0 0.0
        %750 = vmatprep.subr.mxu0 0.0
        %751 = vmatpush1.msra.mxu0 0.0
        %752 = vmatprep.subr.mxu0 0.0
        %753 = vmatpush1.msra.mxu0 0.0
        %754 = vmatprep.subr.mxu0 0.0
        %755 = vmatpush1.msra.mxu0 0.0
        %756 = vmatprep.subr.mxu0 0.0
        %757 = vmatpush1.msra.mxu0 0.0
        %758 = vmatprep.mubr.f32.mxu0 0.0
        %759 = vmatmul.mubr.f32.gmra.mrb[0].mxu0 %v689
        %v760 = vpop.f32.mrb[0].mxu0
        %v761 = vadd.f32 %v681, %v760
        %v762 = vpop.f32.mrb[0].mxu0
        %763 = vmatprep.mubr.f32.mxu0 0.0
        %764 = vmatmul.mubr.f32.gmra.mrb[0].mxu0 %v692
        %v765 = vpop.f32.mrb[0].mxu0
        %v766 = vadd.f32 %v686, %v765
        %v767 = vpop.f32.mrb[0].mxu0
        %768 = vdwg.mxu0
        %v769 = vadd.f32 %v401, %v761
        %v770 = vmul.f32 %v769, 0.70710677
        %771 = vst [vmem:[%s366] sm:$0xff] %v770
        %772 = vst [vmem:[%s373] sm:$0xff] %v766
        %s773 = sand.u32 %s216, 1
        %s774 = scalar_lea.sflag [#allocation3], %s773
        %s775 = sand.u32 %s216, 1
        %s776 = smul.addr %s775, 8
        %s777 = scalar_lea.vmem [#allocation2], %s776
        %s778 = sand.u32 %s244, 1
        %s779 = scalar_lea.sflag [#allocation5], %s778
        %s780 = sand.u32 %s244, 1
        %s781 = smul.addr %s780, 8
        %s782 = scalar_lea.vmem [#allocation4], %s781
        // Predicated region
        $region49: #{tpu_custom_call.1} parent=47 // pred_check
          %p783 = pneg %p226
        $region50: #{tpu_custom_call.1} parent=47 // pred_check_branch
          %785 = sbr.rel (%p783) target = $region52
        $region51: #{tpu_custom_call.1} parent=47 // pred_region
          %s787 = ssub.s32 128, 128
          %788 = vsyncadd %s774, %s787
          %s789 = sadd.s32 %s31, %s30
          %s790 = smul.addr %s789, 128
          %s791 = scalar_lea.hbm %s7, %s790
          %s793 = sshll.u32 %s777, 4
          %s794 = int_to_ptr.vmem [resolvable:$true] %s793
          %796 = dma.vmem_to_hbm [thread:$0]  %s794, 128, %s791, %s774
        $region52: #{tpu_custom_call.1} parent=47 // pred_fallthru
          _
        // Predicated region
        $region53: #{tpu_custom_call.1} parent=47 // pred_check
          %p797 = pneg %p254
        $region54: #{tpu_custom_call.1} parent=47 // pred_check_branch
          %799 = sbr.rel (%p797) target = $region56
        $region55: #{tpu_custom_call.1} parent=47 // pred_region
          %s801 = ssub.s32 128, 128
          %802 = vsyncadd %s779, %s801
          %s803 = sadd.s32 %s31, %s30
          %s804 = smul.addr %s803, 128
          %s805 = scalar_lea.hbm %s8, %s804
          %s807 = sshll.u32 %s782, 4
          %s808 = int_to_ptr.vmem [resolvable:$true] %s807
          %810 = dma.vmem_to_hbm [thread:$0]  %s808, 128, %s805, %s779
        $region56: #{tpu_custom_call.1} parent=47 // pred_fallthru
          _
      $region48: #{tpu_custom_call.1} parent=5 // pred_fallthru
        _
      %p811 = scmp.le.s32.totalorder 2, %s21
      // Predicated region
      $region57: #{tpu_custom_call.1} parent=5 // pred_check
        %p812 = pneg %p811
      $region58: #{tpu_custom_call.1} parent=5 // pred_check_branch
        %814 = sbr.rel (%p812) target = $region60
      $region59: #{tpu_custom_call.1} parent=5 // pred_region
        %s815 = ssub.s32 %s21, 2
        // Predicated region
        $region61: #{tpu_custom_call.1} parent=59 // pred_check
          %p816 = pneg %p232
        $region62: #{tpu_custom_call.1} parent=59 // pred_check_branch
          %818 = sbr.rel (%p816) target = $region64
        $region63: #{tpu_custom_call.1} parent=59 // pred_region
          %s819 = sand.u32 %s217, 1
          %s820 = scalar_lea.sflag [#allocation3], %s819
          %s821 = sand.u32 %s217, 1
          %s822 = smul.addr %s821, 8
          %s823 = scalar_lea.vmem [#allocation2], %s822
          %824 = dma.done %s820, 128
        $region64: #{tpu_custom_call.1} parent=59 // pred_fallthru
          _
        // Predicated region
        $region65: #{tpu_custom_call.1} parent=59 // pred_check
          %p825 = pneg %p260
        $region66: #{tpu_custom_call.1} parent=59 // pred_check_branch
          %827 = sbr.rel (%p825) target = $region68
        $region67: #{tpu_custom_call.1} parent=59 // pred_region
          %s828 = sand.u32 %s245, 1
          %s829 = scalar_lea.sflag [#allocation5], %s828
          %s830 = sand.u32 %s245, 1
          %s831 = smul.addr %s830, 8
          %s832 = scalar_lea.vmem [#allocation4], %s831
          %833 = dma.done %s829, 128
        $region68: #{tpu_custom_call.1} parent=59 // pred_fallthru
          _
      $region60: #{tpu_custom_call.1} parent=5 // pred_fallthru
        _
    $region6: #{tpu_custom_call.1} parent=1 // loop_footer
      %s25 = sadd.s32 1, %s21
    $region7: #{tpu_custom_call.1} parent=1 // loop_footer_branch
      %20 = sbr.rel target = $region3
    $region8: #{tpu_custom_call.1} parent=1 // loop_exit
      _
    %834 = vsyncpa [#allocation3], 1
    %s835 = scalar_lea.sflag [#allocation3], 1
    %836 = vsyncpa %s835, 1
    %837 = vsyncpa [#allocation5], 1
    %s838 = scalar_lea.sflag [#allocation5], 1
    %839 = vsyncpa %s838, 1

</llo_original>
